<compile_context>
chip_gen: v7x
topology: tpu7x:2x2x1
jax: 0.10.0
libtpu: 0.0.40
codegen_flags: <defaults>
</compile_context>

<pallas_src>
import math

import jax
import jax.numpy as jnp
from jax import lax
from jax.experimental import pallas as pl
from jax.experimental.pallas import tpu as pltpu


def _round_up(x, m):
    return ((x + m - 1) // m) * m


# ---------------------------------------------------------------------------
# Pass 1: fused Q / K projection.
#   Q = X @ Wq^T + bq   (1/sqrt(D) already folded into Wq, bq)
#   K = X @ Wk^T + bk
# X is read from HBM exactly once; Q and K are written as bf16 so pass 2 can
# stream them with ordinary BlockSpecs (no unbounded VMEM cache).
# ---------------------------------------------------------------------------
def _qk_projection_kernel(x_ref, wq_ref, bq_ref, wk_ref, bk_ref, q_ref, k_ref):
    x = x_ref[...]                                        # (Tp, D) bf16
    q = lax.dot_general(
        x, wq_ref[...],
        dimension_numbers=(((1,), (1,)), ((), ())),       # X @ Wq^T, no transpose
        preferred_element_type=jnp.float32,
    ) + bq_ref[...]
    k = lax.dot_general(
        x, wk_ref[...],
        dimension_numbers=(((1,), (1,)), ((), ())),       # X @ Wk^T, no transpose
        preferred_element_type=jnp.float32,
    ) + bk_ref[...]
    q_ref[...] = q.astype(q_ref.dtype)
    k_ref[...] = k.astype(k_ref.dtype)


# ---------------------------------------------------------------------------
# Pass 2: scores tile = Q_i @ K_j^T (scale already carried by Q).
# Pure streaming, no scratch, no cross-iteration state -> every axis can be
# pipelined / megacore-sharded freely.
# ---------------------------------------------------------------------------
def _scores_kernel(q_ref, k_ref, o_ref):
    o_ref[...] = lax.dot_general(
        q_ref[...], k_ref[...],
        dimension_numbers=(((1,), (1,)), ((), ())),       # Q @ K^T, no transpose
        preferred_element_type=jnp.float32,
    ).astype(o_ref.dtype)


def self_attention(x, wq, bq, wk, bk, *, out_dtype=jnp.float32):
    """x: (B, N, D); wq/wk: (dim_q, D); bq/bk: (1, dim_q) -> (B, N, N) scores."""
    B, N, D = x.shape
    dim_q = wq.shape[0]
    scale = 1.0 / math.sqrt(D)            # PyTorch divides by sqrt(K), K = data_dim

    # Fold the 1/sqrt(D) scale into the query projection (free at runtime).
    wq = wq.astype(jnp.float32) * scale
    bq = bq.astype(jnp.float32) * scale
    wk = wk.astype(jnp.float32)
    bk = bk.astype(jnp.float32)

    # Pad dim_q to a lane-dense multiple of 128; padded Q/K columns are zero.
    dqp = _round_up(dim_q, 128)
    pad_q = dqp - dim_q
    if pad_q:
        wq = jnp.pad(wq, ((0, pad_q), (0, 0)))
        wk = jnp.pad(wk, ((0, pad_q), (0, 0)))
        bq = jnp.pad(bq, ((0, 0), (0, pad_q)))
        bk = jnp.pad(bk, ((0, 0), (0, pad_q)))

    # Pad N only to a multiple of 128, then pick the largest tiles that divide it.
    Np = _round_up(N, 128)
    if Np != N:
        x = jnp.pad(x, ((0, 0), (0, Np - N), (0, 0)))
    Ti = 256 if Np % 256 == 0 else 128                      # score-tile rows
    Tj = 512 if Np % 512 == 0 else (256 if Np % 256 == 0 else 128)  # score-tile lanes
    Tp = Tj                                                 # projection row tile

    # bf16 MXU operands, f32 accumulation (biases stay f32).
    x_bf = x.astype(jnp.bfloat16)
    wq_bf = wq.astype(jnp.bfloat16)
    wk_bf = wk.astype(jnp.bfloat16)

    # ------------------------- pass 1: Q, K projection ----------------------
    proj_cost = pl.CostEstimate(
        flops=4 * B * Np * D * dqp,
        transcendentals=0,
        bytes_accessed=(B * Np * D * 2          # X (bf16)
                        + 2 * dqp * D * 2       # Wq, Wk (bf16)
                        + 2 * dqp * 4           # biases
                        + 2 * B * Np * dqp * 2  # Q, K out (bf16)
                        ),
    )
    q, k = pl.pallas_call(
        _qk_projection_kernel,
        out_shape=(jax.ShapeDtypeStruct((B, Np, dqp), jnp.bfloat16),
                   jax.ShapeDtypeStruct((B, Np, dqp), jnp.bfloat16)),
        grid_spec=pltpu.PrefetchScalarGridSpec(
            num_scalar_prefetch=0,
            grid=(B, Np // Tp),
            in_specs=[
                pl.BlockSpec((pl.Squeezed(), Tp, D), lambda b, i: (b, i, 0)),
                # Grid-invariant operands: constant block index -> DMA'd once.
                pl.BlockSpec((dqp, D), lambda b, i: (0, 0)),   # Wq (pre-scaled)
                pl.BlockSpec((1, dqp), lambda b, i: (0, 0)),   # bq (pre-scaled)
                pl.BlockSpec((dqp, D), lambda b, i: (0, 0)),   # Wk
                pl.BlockSpec((1, dqp), lambda b, i: (0, 0)),   # bk
            ],
            out_specs=[
                pl.BlockSpec((pl.Squeezed(), Tp, dqp), lambda b, i: (b, i, 0)),
                pl.BlockSpec((pl.Squeezed(), Tp, dqp), lambda b, i: (b, i, 0)),
            ],
        ),
        compiler_params=pltpu.CompilerParams(
            dimension_semantics=("parallel", "parallel")),
        cost_estimate=proj_cost,
    )(x_bf, wq_bf, bq, wk_bf, bk)

    # ------------------------- pass 2: scores = Q K^T -----------------------
    out_bytes = jnp.dtype(out_dtype).itemsize
    score_cost = pl.CostEstimate(
        flops=2 * B * Np * Np * dqp,
        transcendentals=0,
        bytes_accessed=(2 * B * Np * dqp * 2          # Q, K (bf16)
                        + B * Np * Np * out_bytes),   # scores
    )
    out = pl.pallas_call(
        _scores_kernel,
        out_shape=jax.ShapeDtypeStruct((B, Np, Np), out_dtype),
        grid_spec=pltpu.PrefetchScalarGridSpec(
            num_scalar_prefetch=0,
            grid=(B, Np // Ti, Np // Tj),
            in_specs=[
                # Q block index only changes with i -> refetched once per row sweep.
                pl.BlockSpec((pl.Squeezed(), Ti, dqp), lambda b, i, j: (b, i, 0)),
                # K tiles streamed from HBM across j.
                pl.BlockSpec((pl.Squeezed(), Tj, dqp), lambda b, i, j: (b, j, 0)),
            ],
            out_specs=pl.BlockSpec((pl.Squeezed(), Ti, Tj),
                                   lambda b, i, j: (b, i, j)),
        ),
        compiler_params=pltpu.CompilerParams(
            # No cross-iteration state -> batch AND i can shard across TCs (v7x).
            dimension_semantics=("parallel", "parallel", "arbitrary")),
        cost_estimate=score_cost,
    )(q, k)

    return out[:, :N, :N]


def init_linear_params(key, out_features, in_features):
    """Deterministic PyTorch-style nn.Linear init: U(-1/sqrt(fan_in), 1/sqrt(fan_in))."""
    kw, kb = jax.random.split(key)
    bound = 1.0 / math.sqrt(in_features)
    w = jax.random.uniform(kw, (out_features, in_features), jnp.float32, -bound, bound)
    b = jax.random.uniform(kb, (1, out_features), jnp.float32, -bound, bound)
    return w, b


if __name__ == "__main__":
    # Small shapes consistent with the module's forward: X is (B, N, data_dim).
    B, N, data_dim, dim_q = 2, 8, 32, 16

    key = jax.random.PRNGKey(0)
    kx, kq, kk = jax.random.split(key, 3)

    x = jax.random.normal(kx, (B, N, data_dim), jnp.float32)
    wq, bq = init_linear_params(kq, dim_q, data_dim)
    wk, bk = init_linear_params(kk, dim_q, data_dim)

    out = self_attention(x, wq, bq, wk, bk)
    out = jax.block_until_ready(out)

    # Pure-JAX f32 reference (same math as the PyTorch forward). Tolerance is
    # loosened because the kernel feeds the MXU bf16 operands (f32 accumulate).
    q_ref = x @ wq.T + bq
    k_ref = x @ wk.T + bk
    ref = jnp.einsum("bnd,bmd->bnm", q_ref, k_ref) / math.sqrt(data_dim)
    assert out.shape == (B, N, N)
    assert jnp.allclose(out, ref, atol=3e-2, rtol=3e-2), (
        f"max abs diff {jnp.max(jnp.abs(out - ref)):.4e}")

    print("KERNEL_OK")
</pallas_src>

<mosaic_0001>
module attributes {stable_mosaic.version = 11 : i64} {
  func.func @_qk_projection_kernel(%arg0: i32, %arg1: i32, %arg2: memref<1x128x32xbf16, #tpu.memory_space<vmem>>, %arg3: memref<128x32xbf16, #tpu.memory_space<vmem>>, %arg4: memref<1x128xf32, #tpu.memory_space<vmem>>, %arg5: memref<128x32xbf16, #tpu.memory_space<vmem>>, %arg6: memref<1x128xf32, #tpu.memory_space<vmem>>, %arg7: memref<1x128x128xbf16, #tpu.memory_space<vmem>>, %arg8: memref<1x128x128xbf16, #tpu.memory_space<vmem>>) attributes {dimension_semantics = [#tpu.dimension_semantics<parallel>, #tpu.dimension_semantics<parallel>], iteration_bounds = array<i64: 2, 1>, scalar_prefetch = 0 : i64, scratch_operands = 0 : i64, tpu.core_type = #tpu.core_type<tc>, window_params = [{transform_indices = @transform_0, window_bounds = array<i64: 1, 128, 32>}, {pipeline_mode = #tpu.pipeline_mode<synchronous>, transform_indices = @transform_1, window_bounds = array<i64: 128, 32>}, {pipeline_mode = #tpu.pipeline_mode<synchronous>, transform_indices = @transform_2, window_bounds = array<i64: 1, 128>}, {pipeline_mode = #tpu.pipeline_mode<synchronous>, transform_indices = @transform_3, window_bounds = array<i64: 128, 32>}, {pipeline_mode = #tpu.pipeline_mode<synchronous>, transform_indices = @transform_4, window_bounds = array<i64: 1, 128>}, {transform_indices = @transform_5, window_bounds = array<i64: 1, 128, 128>}, {transform_indices = @transform_6, window_bounds = array<i64: 1, 128, 128>}]} {
    %c0 = arith.constant 0 : index
    %c0_0 = arith.constant 0 : index
    %c0_1 = arith.constant 0 : index
    %0 = vector.load %arg2[%c0, %c0_0, %c0_1] : memref<1x128x32xbf16, #tpu.memory_space<vmem>>, vector<1x128x32xbf16>
    %1 = vector.shape_cast %0 : vector<1x128x32xbf16> to vector<128x32xbf16>
    %c0_2 = arith.constant 0 : index
    %c0_3 = arith.constant 0 : index
    %2 = vector.load %arg3[%c0_2, %c0_3] : memref<128x32xbf16, #tpu.memory_space<vmem>>, vector<128x32xbf16>
    %cst = arith.constant dense<0.000000e+00> : vector<128x128xf32>
    %3 = tpu.matmul %1, %2, %cst {dimension_numbers = #tpu.dot_dimension_numbers<[1], [1], [0], [0], [0, 0, 1, 0], [], []>} : vector<128x32xbf16>, vector<128x32xbf16>, vector<128x128xf32> -> vector<128x128xf32>
    %c0_4 = arith.constant 0 : index
    %c0_5 = arith.constant 0 : index
    %4 = vector.load %arg4[%c0_4, %c0_5] : memref<1x128xf32, #tpu.memory_space<vmem>>, vector<1x128xf32>
    %5 = vector.broadcast %4 : vector<1x128xf32> to vector<128x128xf32>
    %6 = arith.addf %3, %5 : vector<128x128xf32>
    %c0_6 = arith.constant 0 : index
    %c0_7 = arith.constant 0 : index
    %7 = vector.load %arg5[%c0_6, %c0_7] : memref<128x32xbf16, #tpu.memory_space<vmem>>, vector<128x32xbf16>
    %cst_8 = arith.constant dense<0.000000e+00> : vector<128x128xf32>
    %8 = tpu.matmul %1, %7, %cst_8 {dimension_numbers = #tpu.dot_dimension_numbers<[1], [1], [0], [0], [0, 0, 1, 0], [], []>} : vector<128x32xbf16>, vector<128x32xbf16>, vector<128x128xf32> -> vector<128x128xf32>
    %c0_9 = arith.constant 0 : index
    %c0_10 = arith.constant 0 : index
    %9 = vector.load %arg6[%c0_9, %c0_10] : memref<1x128xf32, #tpu.memory_space<vmem>>, vector<1x128xf32>
    %10 = vector.broadcast %9 : vector<1x128xf32> to vector<128x128xf32>
    %11 = arith.addf %8, %10 : vector<128x128xf32>
    %12 = arith.truncf %6 : vector<128x128xf32> to vector<128x128xbf16>
    %c0_11 = arith.constant 0 : index
    %c0_12 = arith.constant 0 : index
    %c0_13 = arith.constant 0 : index
    %13 = vector.load %arg7[%c0_11, %c0_12, %c0_13] : memref<1x128x128xbf16, #tpu.memory_space<vmem>>, vector<1x128x128xbf16>
    %14 = vector.shape_cast %13 : vector<1x128x128xbf16> to vector<128x128xbf16>
    %15 = vector.shape_cast %12 : vector<128x128xbf16> to vector<1x128x128xbf16>
    tpu.vector_store %arg7[%c0_11, %c0_12, %c0_13], %15 {strides = array<i32>} : memref<1x128x128xbf16, #tpu.memory_space<vmem>>, vector<1x128x128xbf16>,
    %16 = arith.truncf %11 : vector<128x128xf32> to vector<128x128xbf16>
    %c0_14 = arith.constant 0 : index
    %c0_15 = arith.constant 0 : index
    %c0_16 = arith.constant 0 : index
    %17 = vector.load %arg8[%c0_14, %c0_15, %c0_16] : memref<1x128x128xbf16, #tpu.memory_space<vmem>>, vector<1x128x128xbf16>
    %18 = vector.shape_cast %17 : vector<1x128x128xbf16> to vector<128x128xbf16>
    %19 = vector.shape_cast %16 : vector<128x128xbf16> to vector<1x128x128xbf16>
    tpu.vector_store %arg8[%c0_14, %c0_15, %c0_16], %19 {strides = array<i32>} : memref<1x128x128xbf16, #tpu.memory_space<vmem>>, vector<1x128x128xbf16>,
    return
  }
  func.func @transform_0(%arg0: i32, %arg1: i32) -> (i32, i32, i32) {
    %c0_i32 = arith.constant 0 : i32
    %c0_i32_0 = arith.constant 0 : i32
    return %arg0, %arg1, %c0_i32 : i32, i32, i32
  }
  func.func @transform_1(%arg0: i32, %arg1: i32) -> (i32, i32) {
    %c0_i32 = arith.constant 0 : i32
    %c0_i32_0 = arith.constant 0 : i32
    %c0_i32_1 = arith.constant 0 : i32
    return %c0_i32, %c0_i32_0 : i32, i32
  }
  func.func @transform_2(%arg0: i32, %arg1: i32) -> (i32, i32) {
    %c0_i32 = arith.constant 0 : i32
    %c0_i32_0 = arith.constant 0 : i32
    %c0_i32_1 = arith.constant 0 : i32
    return %c0_i32, %c0_i32_0 : i32, i32
  }
  func.func @transform_3(%arg0: i32, %arg1: i32) -> (i32, i32) {
    %c0_i32 = arith.constant 0 : i32
    %c0_i32_0 = arith.constant 0 : i32
    %c0_i32_1 = arith.constant 0 : i32
    return %c0_i32, %c0_i32_0 : i32, i32
  }
  func.func @transform_4(%arg0: i32, %arg1: i32) -> (i32, i32) {
    %c0_i32 = arith.constant 0 : i32
    %c0_i32_0 = arith.constant 0 : i32
    %c0_i32_1 = arith.constant 0 : i32
    return %c0_i32, %c0_i32_0 : i32, i32
  }
  func.func @transform_5(%arg0: i32, %arg1: i32) -> (i32, i32, i32) {
    %c0_i32 = arith.constant 0 : i32
    %c0_i32_0 = arith.constant 0 : i32
    return %arg0, %arg1, %c0_i32 : i32, i32, i32
  }
  func.func @transform_6(%arg0: i32, %arg1: i32) -> (i32, i32, i32) {
    %c0_i32 = arith.constant 0 : i32
    %c0_i32_0 = arith.constant 0 : i32
    return %arg0, %arg1, %c0_i32 : i32, i32, i32
  }
}

</mosaic_0001>

<llo_original>
// kernel: tpu_custom_call.1
$region0: #{tpu_custom_call.1}
  #allocation0 [shape = 'u32[]', space=smem, size = 0x4, offset = 0x4, fixed_abs, tag = 'smem constant byte address 0x4 - core index']
  #allocation1 [shape = 'u32[144,128]{1,0:T(1,128)}', space=vmem, size = 0x12000, scoped, tag = 'internal scratch']
  %s0 = inlined_call_operand.vmem [shape: bf16[2,128,32], index: 0, kind: input, shape index: {}]
  %s1 = inlined_call_operand.vmem [shape: bf16[128,32], index: 1, kind: input, shape index: {}]
  %s2 = inlined_call_operand.vmem [shape: f32[1,128], index: 2, kind: input, shape index: {}]
  %s3 = inlined_call_operand.vmem [shape: bf16[128,32], index: 3, kind: input, shape index: {}]
  %s4 = inlined_call_operand.vmem [shape: f32[1,128], index: 4, kind: input, shape index: {}]
  %s5 = inlined_call_operand.hbm [shape: bf16[2,128,128], index: 5, kind: output, shape index: {0}]
  %s6 = inlined_call_operand.hbm [shape: bf16[2,128,128], index: 6, kind: output, shape index: {1}]
  %7 = xla_tuple %s5, %s6
  %s8 = sld [smem:[#allocation0]]
  $region61: #{tpu_custom_call.1} parent=0
    _
  %s10 = ssub.s32 1, %s8
  %s11 = scalar_select 0, %s10, %s8
  $region1: #{tpu_custom_call.1} parent=0
    #allocation2 [shape = 'u8[65536]{0}', space=vmem, size = 0x10000, scoped, tag = 'output window, operand 0']
    #allocation3 [shape = 's32[2]{0}', space=sflag, size = 0x8, scoped, tag = 'scoped memory for tpu_custom_call.1']
    #allocation4 [shape = 'u8[65536]{0}', space=vmem, size = 0x10000, scoped, tag = 'output window, operand 1']
    #allocation5 [shape = 's32[2]{0}', space=sflag, size = 0x8, scoped, tag = 'scoped memory for tpu_custom_call.1']
    %12 = vsyncpa [#allocation3], 0
    %s13 = scalar_lea.sflag [#allocation3], 1
    %14 = vsyncpa %s13, 0
    %15 = vsyncpa [#allocation5], 0
    %s16 = scalar_lea.sflag [#allocation5], 1
    %17 = vsyncpa %s16, 0
    loop: start=0, step=1, limit=4
    $region2: #{tpu_custom_call.1} parent=1 // loop_pre_header
      _
    $region3: #{tpu_custom_call.1} parent=1 // loop_header
      %s19 = sphi 0, %s23
      %p20 = scmp.ge.s32.totalorder %s19, 4
      %s26 = sphi 0, %s38
      %s27 = sphi 0, %s34
      %s28 = sphi 0, %s26
      %s29 = sphi 0, %s27
      %s30 = sphi 0, %s28
      %s31 = sphi 0, %s29
      %s43 = sphi 0, %s45
      %s46 = sphi 0, %s43
      %s47 = sphi 0, %s46
      %s63 = sphi 0, %s47
      %s67 = sphi 0, %s67
      %s69 = sphi 0, %s67
      %s70 = sphi 0, %s69
      %s84 = sphi 0, %s70
      %s88 = sphi 0, %s88
      %s90 = sphi 0, %s88
      %s91 = sphi 0, %s90
      %s105 = sphi 0, %s91
      %s109 = sphi 0, %s109
      %s111 = sphi 0, %s109
      %s112 = sphi 0, %s111
      %s126 = sphi 0, %s112
      %s130 = sphi 0, %s130
      %s132 = sphi 0, %s130
      %s133 = sphi 0, %s132
      %s147 = sphi 0, %s133
      %s155 = sphi 0, %s157
      %s158 = sphi 0, %s155
      %s159 = sphi 0, %s158
      %s175 = sphi 0, %s159
      %s183 = sphi 0, %s185
      %s186 = sphi 0, %s183
      %s187 = sphi 0, %s186
      %s203 = sphi 0, %s187
    $region4: #{tpu_custom_call.1} parent=1 // loop_header_branch
      %22 = sbr.rel (%p20) target = $region8
    $region5: #{tpu_custom_call.1} parent=1 // loop_body
      %s24 = ssub.s32 %s19, 1
      %s25 = ssub.s32 %s19, 2
      %s32 = sadd.s32 1, %s27
      %p33 = scmp.ge.s32.totalorder %s32, 1
      %s34 = scalar_select %p33, 0, %s32
      %s35 = sadd.s32 1, %s26
      %s36 = scalar_select %p33, %s35, %s26
      %p37 = scmp.ge.s32.totalorder %s36, 2
      %s38 = scalar_select %p37, 0, %s36
      %s39 = ssub.s32 %s26, %s38
      %s40 = ssub.s32 %s27, %s34
      %s41 = sor.u32 %s39, %s40
      %p42 = scmp.eq.s32.totalorder %s41, 0
      %s44 = sadd.s32 %s43, 1
      %s45 = scalar_select %p42, %s43, %s44
      %p48 = pneg %p42
      %p49 = scmp.eq.s32.totalorder %s19, 1
      %p50 = por %p48, %p49
      %p51 = scmp.ne.s32.totalorder %s43, %s46
      %p52 = scmp.eq.s32.totalorder %s19, 0
      %p53 = por %p51, %p52
      %p54 = scmp.ne.s32.totalorder %s43, %s46
      %p55 = scmp.eq.s32.totalorder %s24, 1
      %p56 = por %p54, %p55
      %p57 = scmp.ne.s32.totalorder %s46, %s47
      %p58 = scmp.eq.s32.totalorder %s24, 0
      %p59 = por %p57, %p58
      %p60 = scmp.ne.s32.totalorder %s46, %s47
      %p61 = scmp.eq.s32.totalorder %s25, 1
      %p62 = por %p60, %p61
      %p64 = scmp.ne.s32.totalorder %s47, %s63
      %p65 = scmp.eq.s32.totalorder %s25, 0
      %p66 = por %p64, %p65
      %s68 = sadd.s32 %s67, 1
      %p71 = scmp.eq.s32.totalorder %s19, 1
      %p72 = scmp.ne.s32.totalorder %s67, %s69
      %p73 = scmp.eq.s32.totalorder %s19, 0
      %p74 = por %p72, %p73
      %p75 = scmp.ne.s32.totalorder %s67, %s69
      %p76 = scmp.eq.s32.totalorder %s24, 1
      %p77 = por %p75, %p76
      %p78 = scmp.ne.s32.totalorder %s69, %s70
      %p79 = scmp.eq.s32.totalorder %s24, 0
      %p80 = por %p78, %p79
      %p81 = scmp.ne.s32.totalorder %s69, %s70
      %p82 = scmp.eq.s32.totalorder %s25, 1
      %p83 = por %p81, %p82
      %p85 = scmp.ne.s32.totalorder %s70, %s84
      %p86 = scmp.eq.s32.totalorder %s25, 0
      %p87 = por %p85, %p86
      %s89 = sadd.s32 %s88, 1
      %p92 = scmp.eq.s32.totalorder %s19, 1
      %p93 = scmp.ne.s32.totalorder %s88, %s90
      %p94 = scmp.eq.s32.totalorder %s19, 0
      %p95 = por %p93, %p94
      %p96 = scmp.ne.s32.totalorder %s88, %s90
      %p97 = scmp.eq.s32.totalorder %s24, 1
      %p98 = por %p96, %p97
      %p99 = scmp.ne.s32.totalorder %s90, %s91
      %p100 = scmp.eq.s32.totalorder %s24, 0
      %p101 = por %p99, %p100
      %p102 = scmp.ne.s32.totalorder %s90, %s91
      %p103 = scmp.eq.s32.totalorder %s25, 1
      %p104 = por %p102, %p103
      %p106 = scmp.ne.s32.totalorder %s91, %s105
      %p107 = scmp.eq.s32.totalorder %s25, 0
      %p108 = por %p106, %p107
      %s110 = sadd.s32 %s109, 1
      %p113 = scmp.eq.s32.totalorder %s19, 1
      %p114 = scmp.ne.s32.totalorder %s109, %s111
      %p115 = scmp.eq.s32.totalorder %s19, 0
      %p116 = por %p114, %p115
      %p117 = scmp.ne.s32.totalorder %s109, %s111
      %p118 = scmp.eq.s32.totalorder %s24, 1
      %p119 = por %p117, %p118
      %p120 = scmp.ne.s32.totalorder %s111, %s112
      %p121 = scmp.eq.s32.totalorder %s24, 0
      %p122 = por %p120, %p121
      %p123 = scmp.ne.s32.totalorder %s111, %s112
      %p124 = scmp.eq.s32.totalorder %s25, 1
      %p125 = por %p123, %p124
      %p127 = scmp.ne.s32.totalorder %s112, %s126
      %p128 = scmp.eq.s32.totalorder %s25, 0
      %p129 = por %p127, %p128
      %s131 = sadd.s32 %s130, 1
      %p134 = scmp.eq.s32.totalorder %s19, 1
      %p135 = scmp.ne.s32.totalorder %s130, %s132
      %p136 = scmp.eq.s32.totalorder %s19, 0
      %p137 = por %p135, %p136
      %p138 = scmp.ne.s32.totalorder %s130, %s132
      %p139 = scmp.eq.s32.totalorder %s24, 1
      %p140 = por %p138, %p139
      %p141 = scmp.ne.s32.totalorder %s132, %s133
      %p142 = scmp.eq.s32.totalorder %s24, 0
      %p143 = por %p141, %p142
      %p144 = scmp.ne.s32.totalorder %s132, %s133
      %p145 = scmp.eq.s32.totalorder %s25, 1
      %p146 = por %p144, %p145
      %p148 = scmp.ne.s32.totalorder %s133, %s147
      %p149 = scmp.eq.s32.totalorder %s25, 0
      %p150 = por %p148, %p149
      %s151 = ssub.s32 %s26, %s38
      %s152 = ssub.s32 %s27, %s34
      %s153 = sor.u32 %s151, %s152
      %p154 = scmp.eq.s32.totalorder %s153, 0
      %s156 = sadd.s32 %s155, 1
      %s157 = scalar_select %p154, %s155, %s156
      %p160 = pneg %p154
      %p161 = scmp.eq.s32.totalorder %s19, 1
      %p162 = por %p160, %p161
      %p163 = scmp.ne.s32.totalorder %s155, %s158
      %p164 = scmp.eq.s32.totalorder %s19, 0
      %p165 = por %p163, %p164
      %p166 = scmp.ne.s32.totalorder %s155, %s158
      %p167 = scmp.eq.s32.totalorder %s24, 1
      %p168 = por %p166, %p167
      %p169 = scmp.ne.s32.totalorder %s158, %s159
      %p170 = scmp.eq.s32.totalorder %s24, 0
      %p171 = por %p169, %p170
      %p172 = scmp.ne.s32.totalorder %s158, %s159
      %p173 = scmp.eq.s32.totalorder %s25, 1
      %p174 = por %p172, %p173
      %p176 = scmp.ne.s32.totalorder %s159, %s175
      %p177 = scmp.eq.s32.totalorder %s25, 0
      %p178 = por %p176, %p177
      %s179 = ssub.s32 %s26, %s38
      %s180 = ssub.s32 %s27, %s34
      %s181 = sor.u32 %s179, %s180
      %p182 = scmp.eq.s32.totalorder %s181, 0
      %s184 = sadd.s32 %s183, 1
      %s185 = scalar_select %p182, %s183, %s184
      %p188 = pneg %p182
      %p189 = scmp.eq.s32.totalorder %s19, 1
      %p190 = por %p188, %p189
      %p191 = scmp.ne.s32.totalorder %s183, %s186
      %p192 = scmp.eq.s32.totalorder %s19, 0
      %p193 = por %p191, %p192
      %p194 = scmp.ne.s32.totalorder %s183, %s186
      %p195 = scmp.eq.s32.totalorder %s24, 1
      %p196 = por %p194, %p195
      %p197 = scmp.ne.s32.totalorder %s186, %s187
      %p198 = scmp.eq.s32.totalorder %s24, 0
      %p199 = por %p197, %p198
      %p200 = scmp.ne.s32.totalorder %s186, %s187
      %p201 = scmp.eq.s32.totalorder %s25, 1
      %p202 = por %p200, %p201
      %p204 = scmp.ne.s32.totalorder %s187, %s203
      %p205 = scmp.eq.s32.totalorder %s25, 0
      %p206 = por %p204, %p205
      %p207 = scmp.le.s32.totalorder 1, %s19
      %p208 = scmp.lt.s32.totalorder %s19, 3
      %p209 = pnand %p207, %p208
      %p210 = pneg %p209
      // Predicated region
      $region9: #{tpu_custom_call.1} parent=5 // pred_check
        _
      $region10: #{tpu_custom_call.1} parent=5 // pred_check_branch
        %212 = sbr.rel (%p209) target = $region12
      $region11: #{tpu_custom_call.1} parent=5 // pred_region
        %s213 = ssub.s32 %s19, 1
        // Predicated region
        $region13: #{tpu_custom_call.1} parent=11 // pred_check
          %p214 = pneg %p80
        $region14: #{tpu_custom_call.1} parent=11 // pred_check_branch
          %216 = sbr.rel (%p214) target = $region16
        $region15: #{tpu_custom_call.1} parent=11 // pred_region
          _
        $region16: #{tpu_custom_call.1} parent=11 // pred_fallthru
          _
        // Predicated region
        $region17: #{tpu_custom_call.1} parent=11 // pred_check
          %p217 = pneg %p101
        $region18: #{tpu_custom_call.1} parent=11 // pred_check_branch
          %219 = sbr.rel (%p217) target = $region20
        $region19: #{tpu_custom_call.1} parent=11 // pred_region
          _
        $region20: #{tpu_custom_call.1} parent=11 // pred_fallthru
          _
        // Predicated region
        $region21: #{tpu_custom_call.1} parent=11 // pred_check
          %p220 = pneg %p122
        $region22: #{tpu_custom_call.1} parent=11 // pred_check_branch
          %222 = sbr.rel (%p220) target = $region24
        $region23: #{tpu_custom_call.1} parent=11 // pred_region
          _
        $region24: #{tpu_custom_call.1} parent=11 // pred_fallthru
          _
        // Predicated region
        $region25: #{tpu_custom_call.1} parent=11 // pred_check
          %p223 = pneg %p143
        $region26: #{tpu_custom_call.1} parent=11 // pred_check_branch
          %225 = sbr.rel (%p223) target = $region28
        $region27: #{tpu_custom_call.1} parent=11 // pred_region
          _
        $region28: #{tpu_custom_call.1} parent=11 // pred_fallthru
          _
      $region12: #{tpu_custom_call.1} parent=5 // pred_fallthru
        _
      %p226 = scmp.lt.s32.totalorder %s19, 2
      // Predicated region
      $region29: #{tpu_custom_call.1} parent=5 // pred_check
        %p227 = pneg %p226
      $region30: #{tpu_custom_call.1} parent=5 // pred_check_branch
        %229 = sbr.rel (%p227) target = $region32
      $region31: #{tpu_custom_call.1} parent=5 // pred_region
        // Predicated region
        $region33: #{tpu_custom_call.1} parent=31 // pred_check
          %p230 = pneg %p53
        $region34: #{tpu_custom_call.1} parent=31 // pred_check_branch
          %232 = sbr.rel (%p230) target = $region36
        $region35: #{tpu_custom_call.1} parent=31 // pred_region
          %s233 = smul.u32 16, %s27
          %p234 = scmp.lt.s32.totalorder %s26, 1
          %s235 = scalar_select %p234, %s26, 1
          %p236 = scmp.lt.s32.totalorder %s233, 15
          %s237 = scalar_select %p236, %s233, 15
          %s238 = smul.addr %s235, 16
          %s239 = sadd.s32 %s237, %s238
          %s240 = smul.addr %s239, 4
          %s241 = scalar_lea.vmem %s0, %s240
          %s242 = smul.u32 16, %s27
        $region36: #{tpu_custom_call.1} parent=31 // pred_fallthru
          _
      $region32: #{tpu_custom_call.1} parent=5 // pred_fallthru
        _
      %p243 = scmp.le.s32.totalorder 1, %s19
      %p244 = scmp.lt.s32.totalorder %s19, 3
      %p245 = pnand %p243, %p244
      %p246 = pneg %p245
      // Predicated region
      $region37: #{tpu_custom_call.1} parent=5 // pred_check
        _
      $region38: #{tpu_custom_call.1} parent=5 // pred_check_branch
        %248 = sbr.rel (%p245) target = $region40
      $region39: #{tpu_custom_call.1} parent=5 // pred_region
        %s249 = ssub.s32 %s19, 1
        %s250 = smul.u32 16, %s29
        %p251 = scmp.lt.s32.totalorder %s28, 1
        %s252 = scalar_select %p251, %s28, 1
        %p253 = scmp.lt.s32.totalorder %s250, 15
        %s254 = scalar_select %p253, %s250, 15
        %s255 = smul.addr %s252, 16
        %s256 = sadd.s32 %s254, %s255
        %s257 = smul.addr %s256, 4
        %s258 = scalar_lea.vmem %s0, %s257
        %p259 = pneg %p59
        %p260 = pneg %p56
        %p261 = pneg %p80
        %p262 = pneg %p77
        %p263 = pneg %p101
        %p264 = pneg %p98
        %p265 = pneg %p122
        %p266 = pneg %p119
        %p267 = pneg %p143
        %p268 = pneg %p140
        %p269 = pneg %p171
        %p270 = pneg %p168
        %s271 = sand.u32 %s158, 1
        %s272 = scalar_lea.sflag [#allocation3], %s271
        %s273 = sand.u32 %s158, 1
        %s274 = smul.addr %s273, 64
        %s275 = scalar_lea.vmem [#allocation2], %s274
        %p276 = pneg %p199
        %p277 = pneg %p196
        %s278 = sand.u32 %s186, 1
        %s279 = scalar_lea.sflag [#allocation5], %s278
        %s280 = sand.u32 %s186, 1
        %s281 = smul.addr %s280, 64
        %s282 = scalar_lea.vmem [#allocation4], %s281
        %s283 = smul.u32 16, %s29
        %p284 = scmp.lt.s32.totalorder %s28, 1
        %s285 = scalar_select %p284, %s28, 1
        %p286 = scmp.lt.s32.totalorder %s283, 15
        %s287 = scalar_select %p286, %s283, 15
        %s288 = smul.addr %s285, 16
        %s289 = sadd.s32 %s287, %s288
        %s290 = smul.addr %s289, 4
        %s291 = scalar_lea.vmem %s0, %s290
        %s292 = smul.u32 16, %s29
        %s293 = smul.u32 16, %s29
        %s294 = smul.u32 16, %s29
        %v296 = vld [vmem:[%s291] sm:$0xf]
        %v297 = vld [vmem:[%s291 + $0x4] sm:$0xf]
        %v298 = vld [vmem:[%s291 + $0x8] sm:$0xf]
        %v299 = vld [vmem:[%s291 + $0xc] sm:$0xf]
        %v300 = vld [vmem:[%s291 + $0x10] sm:$0xf]
        %v301 = vld [vmem:[%s291 + $0x14] sm:$0xf]
        %v302 = vld [vmem:[%s291 + $0x18] sm:$0xf]
        %v303 = vld [vmem:[%s291 + $0x1c] sm:$0xf]
        %v304 = vld [vmem:[%s291 + $0x20] sm:$0xf]
        %v305 = vld [vmem:[%s291 + $0x24] sm:$0xf]
        %v306 = vld [vmem:[%s291 + $0x28] sm:$0xf]
        %v307 = vld [vmem:[%s291 + $0x2c] sm:$0xf]
        %v308 = vld [vmem:[%s291 + $0x30] sm:$0xf]
        %v309 = vld [vmem:[%s291 + $0x34] sm:$0xf]
        %v310 = vld [vmem:[%s291 + $0x38] sm:$0xf]
        %v311 = vld [vmem:[%s291 + $0x3c] sm:$0xf]
        %v312 = vld [vmem:[%s1] sm:$0xf]
        %v313 = vld [vmem:[%s1 + $0x4] sm:$0xf]
        %v314 = vld [vmem:[%s1 + $0x8] sm:$0xf]
        %v315 = vld [vmem:[%s1 + $0xc] sm:$0xf]
        %v316 = vld [vmem:[%s1 + $0x10] sm:$0xf]
        %v317 = vld [vmem:[%s1 + $0x14] sm:$0xf]
        %v318 = vld [vmem:[%s1 + $0x18] sm:$0xf]
        %v319 = vld [vmem:[%s1 + $0x1c] sm:$0xf]
        %v320 = vld [vmem:[%s1 + $0x20] sm:$0xf]
        %v321 = vld [vmem:[%s1 + $0x24] sm:$0xf]
        %v322 = vld [vmem:[%s1 + $0x28] sm:$0xf]
        %v323 = vld [vmem:[%s1 + $0x2c] sm:$0xf]
        %v324 = vld [vmem:[%s1 + $0x30] sm:$0xf]
        %v325 = vld [vmem:[%s1 + $0x34] sm:$0xf]
        %v326 = vld [vmem:[%s1 + $0x38] sm:$0xf]
        %v327 = vld [vmem:[%s1 + $0x3c] sm:$0xf]
        %v328 = vld [vmem:[%s2] sm:$0x1]
        %v330 = vlaneseq
        %v331 = vshrl.u32 %v330, 7
        %v332 = vsub.s32 0, %v331
        %v333 = vrot.slane %v328, %v332
        %v351 = vunpack.c.l.b16 %v296
        %v352 = vunpack.c.l.b16 %v297
        %v353 = vunpack.c.l.b16 %v298
        %v354 = vunpack.c.l.b16 %v299
        %v355 = vunpack.c.l.b16 %v300
        %v356 = vunpack.c.l.b16 %v301
        %v357 = vunpack.c.l.b16 %v302
        %v358 = vunpack.c.l.b16 %v303
        %v359 = vunpack.c.l.b16 %v304
        %v360 = vunpack.c.l.b16 %v305
        %v361 = vunpack.c.l.b16 %v306
        %v362 = vunpack.c.l.b16 %v307
        %v363 = vunpack.c.l.b16 %v308
        %v364 = vunpack.c.l.b16 %v309
        %v365 = vunpack.c.l.b16 %v310
        %v366 = vunpack.c.l.b16 %v311
        %v367 = vpack.c.b16 %v352, %v351
        %v368 = vpack.c.b16 %v354, %v353
        %v369 = vpack.c.b16 %v356, %v355
        %v370 = vpack.c.b16 %v358, %v357
        %v371 = vpack.c.b16 %v360, %v359
        %v372 = vpack.c.b16 %v362, %v361
        %v373 = vpack.c.b16 %v364, %v363
        %v374 = vpack.c.b16 %v366, %v365
        %v391 = vunpack.c.l.b16 %v312
        %v392 = vunpack.c.l.b16 %v313
        %v393 = vunpack.c.l.b16 %v314
        %v394 = vunpack.c.l.b16 %v315
        %v395 = vunpack.c.l.b16 %v316
        %v396 = vunpack.c.l.b16 %v317
        %v397 = vunpack.c.l.b16 %v318
        %v398 = vunpack.c.l.b16 %v319
        %v399 = vunpack.c.l.b16 %v320
        %v400 = vunpack.c.l.b16 %v321
        %v401 = vunpack.c.l.b16 %v322
        %v402 = vunpack.c.l.b16 %v323
        %v403 = vunpack.c.l.b16 %v324
        %v404 = vunpack.c.l.b16 %v325
        %v405 = vunpack.c.l.b16 %v326
        %v406 = vunpack.c.l.b16 %v327
        %v407 = vpack.c.b16 %v392, %v391
        %v408 = vpack.c.b16 %v394, %v393
        %v409 = vpack.c.b16 %v396, %v395
        %v410 = vpack.c.b16 %v398, %v397
        %v411 = vpack.c.b16 %v400, %v399
        %v412 = vpack.c.b16 %v402, %v401
        %v413 = vpack.c.b16 %v404, %v403
        %v414 = vpack.c.b16 %v406, %v405
        %vm415 = vcmask 261120
        %v417 = vsel %vm415, %v367, 0
        %v420 = vsel %vm415, %v368, 0
        %v423 = vsel %vm415, %v369, 0
        %v426 = vsel %vm415, %v370, 0
        %v429 = vsel %vm415, %v371, 0
        %v432 = vsel %vm415, %v372, 0
        %v435 = vsel %vm415, %v373, 0
        %v438 = vsel %vm415, %v374, 0
        %v441 = vsel %vm415, %v407, 0
        %v444 = vsel %vm415, %v408, 0
        %v447 = vsel %vm415, %v409, 0
        %v450 = vsel %vm415, %v410, 0
        %v453 = vsel %vm415, %v411, 0
        %v456 = vsel %vm415, %v412, 0
        %v459 = vsel %vm415, %v413, 0
        %v462 = vsel %vm415, %v414, 0
        %464 = vmatprep.subr.bf16.mxu0 0
        %465 = vmatpush1.bf16.xpose.msra.mxu0 %v441
        %466 = vmatprep.subr.bf16.mxu0 0
        %467 = vmatpush1.bf16.xpose.msra.mxu0 %v444
        %468 = vmatprep.subr.bf16.mxu0 0
        %469 = vmatpush1.bf16.xpose.msra.mxu0 %v447
        %470 = vmatprep.subr.bf16.mxu0 0
        %471 = vmatpush1.bf16.xpose.msra.mxu0 %v450
        %472 = vmatprep.subr.bf16.mxu0 0
        %473 = vmatpush1.bf16.xpose.msra.mxu0 %v453
        %474 = vmatprep.subr.bf16.mxu0 0
        %475 = vmatpush1.bf16.xpose.msra.mxu0 %v456
        %476 = vmatprep.subr.bf16.mxu0 0
        %477 = vmatpush1.bf16.xpose.msra.mxu0 %v459
        %478 = vmatprep.subr.bf16.mxu0 0
        %479 = vmatpush1.bf16.xpose.msra.mxu0 %v462
        %480 = vmatprep.subr.bf16.mxu0 0
        %481 = vmatpush1.bf16.xpose.msra.mxu0 0
        %482 = vmatprep.subr.bf16.mxu0 0
        %483 = vmatpush1.bf16.xpose.msra.mxu0 0
        %484 = vmatprep.subr.bf16.mxu0 0
        %485 = vmatpush1.bf16.xpose.msra.mxu0 0
        %486 = vmatprep.subr.bf16.mxu0 0
        %487 = vmatpush1.bf16.xpose.msra.mxu0 0
        %488 = vmatprep.subr.bf16.mxu0 0
        %489 = vmatpush1.bf16.xpose.msra.mxu0 0
        %490 = vmatprep.subr.bf16.mxu0 0
        %491 = vmatpush1.bf16.xpose.msra.mxu0 0
        %492 = vmatprep.subr.bf16.mxu0 0
        %493 = vmatpush1.bf16.xpose.msra.mxu0 0
        %494 = vmatprep.subr.bf16.mxu0 0
        %495 = vmatpush1.bf16.xpose.msra.mxu0 0
        %496 = vmatprep.mubr.bf16.mxu0 0
        %497 = vmatmul.mubr.bf16.gmra.mrb[0].mxu0 %v417
        %v498 = vpop.f32.mrb[0].mxu0
        %v499 = vadd.f32 %v333, %v498
        %v500 = vpop.f32.mrb[0].mxu0
        %v501 = vpop.f32.mrb[0].mxu0
        %v502 = vadd.f32 %v333, %v501
        %v503 = vpop.f32.mrb[0].mxu0
        %504 = vmatprep.mubr.bf16.mxu0 0
        %505 = vmatmul.mubr.bf16.gmra.mrb[0].mxu0 %v420
        %v506 = vpop.f32.mrb[0].mxu0
        %v507 = vadd.f32 %v333, %v506
        %v508 = vpop.f32.mrb[0].mxu0
        %v509 = vpop.f32.mrb[0].mxu0
        %v510 = vadd.f32 %v333, %v509
        %v511 = vpop.f32.mrb[0].mxu0
        %512 = vmatprep.mubr.bf16.mxu0 0
        %513 = vmatmul.mubr.bf16.gmra.mrb[0].mxu0 %v423
        %v514 = vpop.f32.mrb[0].mxu0
        %v515 = vadd.f32 %v333, %v514
        %v516 = vpop.f32.mrb[0].mxu0
        %v517 = vpop.f32.mrb[0].mxu0
        %v518 = vadd.f32 %v333, %v517
        %v519 = vpop.f32.mrb[0].mxu0
        %520 = vmatprep.mubr.bf16.mxu0 0
        %521 = vmatmul.mubr.bf16.gmra.mrb[0].mxu0 %v426
        %v522 = vpop.f32.mrb[0].mxu0
        %v523 = vadd.f32 %v333, %v522
        %v524 = vpop.f32.mrb[0].mxu0
        %v525 = vpop.f32.mrb[0].mxu0
        %v526 = vadd.f32 %v333, %v525
        %v527 = vpop.f32.mrb[0].mxu0
        %528 = vmatprep.mubr.bf16.mxu0 0
        %529 = vmatmul.mubr.bf16.gmra.mrb[0].mxu0 %v429
        %v530 = vpop.f32.mrb[0].mxu0
        %v531 = vadd.f32 %v333, %v530
        %v532 = vpop.f32.mrb[0].mxu0
        %v533 = vpop.f32.mrb[0].mxu0
        %v534 = vadd.f32 %v333, %v533
        %v535 = vpop.f32.mrb[0].mxu0
        %536 = vmatprep.mubr.bf16.mxu0 0
        %537 = vmatmul.mubr.bf16.gmra.mrb[0].mxu0 %v432
        %v538 = vpop.f32.mrb[0].mxu0
        %v539 = vadd.f32 %v333, %v538
        %v540 = vpop.f32.mrb[0].mxu0
        %v541 = vpop.f32.mrb[0].mxu0
        %v542 = vadd.f32 %v333, %v541
        %v543 = vpop.f32.mrb[0].mxu0
        %544 = vmatprep.mubr.bf16.mxu0 0
        %545 = vmatmul.mubr.bf16.gmra.mrb[0].mxu0 %v435
        %v546 = vpop.f32.mrb[0].mxu0
        %v547 = vadd.f32 %v333, %v546
        %v548 = vpop.f32.mrb[0].mxu0
        %v549 = vpop.f32.mrb[0].mxu0
        %v550 = vadd.f32 %v333, %v549
        %v551 = vpop.f32.mrb[0].mxu0
        %552 = vmatprep.mubr.bf16.mxu0 0
        %553 = vmatmul.mubr.bf16.gmra.mrb[0].mxu0 %v438
        %v554 = vpop.f32.mrb[0].mxu0
        %v555 = vadd.f32 %v333, %v554
        %v556 = vpop.f32.mrb[0].mxu0
        %v557 = vpop.f32.mrb[0].mxu0
        %v558 = vadd.f32 %v333, %v557
        %v559 = vpop.f32.mrb[0].mxu0
        %560 = vdwg.mxu0
        %v561 = vld [vmem:[%s3] sm:$0xf]
        %v562 = vld [vmem:[%s3 + $0x4] sm:$0xf]
        %v563 = vld [vmem:[%s3 + $0x8] sm:$0xf]
        %v564 = vld [vmem:[%s3 + $0xc] sm:$0xf]
        %v565 = vld [vmem:[%s3 + $0x10] sm:$0xf]
        %v566 = vld [vmem:[%s3 + $0x14] sm:$0xf]
        %v567 = vld [vmem:[%s3 + $0x18] sm:$0xf]
        %v568 = vld [vmem:[%s3 + $0x1c] sm:$0xf]
        %v569 = vld [vmem:[%s3 + $0x20] sm:$0xf]
        %v570 = vld [vmem:[%s3 + $0x24] sm:$0xf]
        %v571 = vld [vmem:[%s3 + $0x28] sm:$0xf]
        %v572 = vld [vmem:[%s3 + $0x2c] sm:$0xf]
        %v573 = vld [vmem:[%s3 + $0x30] sm:$0xf]
        %v574 = vld [vmem:[%s3 + $0x34] sm:$0xf]
        %v575 = vld [vmem:[%s3 + $0x38] sm:$0xf]
        %v576 = vld [vmem:[%s3 + $0x3c] sm:$0xf]
        %v577 = vld [vmem:[%s4] sm:$0x1]
        %v579 = vlaneseq
        %v580 = vshrl.u32 %v579, 7
        %v581 = vsub.s32 0, %v580
        %v582 = vrot.slane %v577, %v581
        %v600 = vunpack.c.l.b16 %v561
        %v601 = vunpack.c.l.b16 %v562
        %v602 = vunpack.c.l.b16 %v563
        %v603 = vunpack.c.l.b16 %v564
        %v604 = vunpack.c.l.b16 %v565
        %v605 = vunpack.c.l.b16 %v566
        %v606 = vunpack.c.l.b16 %v567
        %v607 = vunpack.c.l.b16 %v568
        %v608 = vunpack.c.l.b16 %v569
        %v609 = vunpack.c.l.b16 %v570
        %v610 = vunpack.c.l.b16 %v571
        %v611 = vunpack.c.l.b16 %v572
        %v612 = vunpack.c.l.b16 %v573
        %v613 = vunpack.c.l.b16 %v574
        %v614 = vunpack.c.l.b16 %v575
        %v615 = vunpack.c.l.b16 %v576
        %v616 = vpack.c.b16 %v601, %v600
        %v617 = vpack.c.b16 %v603, %v602
        %v618 = vpack.c.b16 %v605, %v604
        %v619 = vpack.c.b16 %v607, %v606
        %v620 = vpack.c.b16 %v609, %v608
        %v621 = vpack.c.b16 %v611, %v610
        %v622 = vpack.c.b16 %v613, %v612
        %v623 = vpack.c.b16 %v615, %v614
        %v625 = vsel %vm415, %v616, 0
        %v628 = vsel %vm415, %v617, 0
        %v631 = vsel %vm415, %v618, 0
        %v634 = vsel %vm415, %v619, 0
        %v637 = vsel %vm415, %v620, 0
        %v640 = vsel %vm415, %v621, 0
        %v643 = vsel %vm415, %v622, 0
        %v646 = vsel %vm415, %v623, 0
        %648 = vmatprep.subr.bf16.mxu0 0
        %649 = vmatpush1.bf16.xpose.msra.mxu0 %v625
        %650 = vmatprep.subr.bf16.mxu0 0
        %651 = vmatpush1.bf16.xpose.msra.mxu0 %v628
        %652 = vmatprep.subr.bf16.mxu0 0
        %653 = vmatpush1.bf16.xpose.msra.mxu0 %v631
        %654 = vmatprep.subr.bf16.mxu0 0
        %655 = vmatpush1.bf16.xpose.msra.mxu0 %v634
        %656 = vmatprep.subr.bf16.mxu0 0
        %657 = vmatpush1.bf16.xpose.msra.mxu0 %v637
        %658 = vmatprep.subr.bf16.mxu0 0
        %659 = vmatpush1.bf16.xpose.msra.mxu0 %v640
        %660 = vmatprep.subr.bf16.mxu0 0
        %661 = vmatpush1.bf16.xpose.msra.mxu0 %v643
        %662 = vmatprep.subr.bf16.mxu0 0
        %663 = vmatpush1.bf16.xpose.msra.mxu0 %v646
        %664 = vmatprep.subr.bf16.mxu0 0
        %665 = vmatpush1.bf16.xpose.msra.mxu0 0
        %666 = vmatprep.subr.bf16.mxu0 0
        %667 = vmatpush1.bf16.xpose.msra.mxu0 0
        %668 = vmatprep.subr.bf16.mxu0 0
        %669 = vmatpush1.bf16.xpose.msra.mxu0 0
        %670 = vmatprep.subr.bf16.mxu0 0
        %671 = vmatpush1.bf16.xpose.msra.mxu0 0
        %672 = vmatprep.subr.bf16.mxu0 0
        %673 = vmatpush1.bf16.xpose.msra.mxu0 0
        %674 = vmatprep.subr.bf16.mxu0 0
        %675 = vmatpush1.bf16.xpose.msra.mxu0 0
        %676 = vmatprep.subr.bf16.mxu0 0
        %677 = vmatpush1.bf16.xpose.msra.mxu0 0
        %678 = vmatprep.subr.bf16.mxu0 0
        %679 = vmatpush1.bf16.xpose.msra.mxu0 0
        %680 = vmatprep.mubr.bf16.mxu0 0
        %681 = vmatmul.mubr.bf16.gmra.mrb[0].mxu0 %v417
        %v682 = vpop.f32.mrb[0].mxu0
        %v683 = vadd.f32 %v582, %v682
        %v684 = vpop.f32.mrb[0].mxu0
        %v685 = vpop.f32.mrb[0].mxu0
        %v686 = vadd.f32 %v582, %v685
        %v687 = vpop.f32.mrb[0].mxu0
        %688 = vmatprep.mubr.bf16.mxu0 0
        %689 = vmatmul.mubr.bf16.gmra.mrb[0].mxu0 %v420
        %v690 = vpop.f32.mrb[0].mxu0
        %v691 = vadd.f32 %v582, %v690
        %v692 = vpop.f32.mrb[0].mxu0
        %v693 = vpop.f32.mrb[0].mxu0
        %v694 = vadd.f32 %v582, %v693
        %v695 = vpop.f32.mrb[0].mxu0
        %696 = vmatprep.mubr.bf16.mxu0 0
        %697 = vmatmul.mubr.bf16.gmra.mrb[0].mxu0 %v423
        %v698 = vpop.f32.mrb[0].mxu0
        %v699 = vadd.f32 %v582, %v698
        %v700 = vpop.f32.mrb[0].mxu0
        %v701 = vpop.f32.mrb[0].mxu0
        %v702 = vadd.f32 %v582, %v701
        %v703 = vpop.f32.mrb[0].mxu0
        %704 = vmatprep.mubr.bf16.mxu0 0
        %705 = vmatmul.mubr.bf16.gmra.mrb[0].mxu0 %v426
        %v706 = vpop.f32.mrb[0].mxu0
        %v707 = vadd.f32 %v582, %v706
        %v708 = vpop.f32.mrb[0].mxu0
        %v709 = vpop.f32.mrb[0].mxu0
        %v710 = vadd.f32 %v582, %v709
        %v711 = vpop.f32.mrb[0].mxu0
        %712 = vmatprep.mubr.bf16.mxu0 0
        %713 = vmatmul.mubr.bf16.gmra.mrb[0].mxu0 %v429
        %v714 = vpop.f32.mrb[0].mxu0
        %v715 = vadd.f32 %v582, %v714
        %v716 = vpop.f32.mrb[0].mxu0
        %v717 = vpop.f32.mrb[0].mxu0
        %v718 = vadd.f32 %v582, %v717
        %v719 = vpop.f32.mrb[0].mxu0
        %720 = vmatprep.mubr.bf16.mxu0 0
        %721 = vmatmul.mubr.bf16.gmra.mrb[0].mxu0 %v432
        %v722 = vpop.f32.mrb[0].mxu0
        %v723 = vadd.f32 %v582, %v722
        %v724 = vpop.f32.mrb[0].mxu0
        %v725 = vpop.f32.mrb[0].mxu0
        %v726 = vadd.f32 %v582, %v725
        %v727 = vpop.f32.mrb[0].mxu0
        %728 = vmatprep.mubr.bf16.mxu0 0
        %729 = vmatmul.mubr.bf16.gmra.mrb[0].mxu0 %v435
        %v730 = vpop.f32.mrb[0].mxu0
        %v731 = vadd.f32 %v582, %v730
        %v732 = vpop.f32.mrb[0].mxu0
        %v733 = vpop.f32.mrb[0].mxu0
        %v734 = vadd.f32 %v582, %v733
        %v735 = vpop.f32.mrb[0].mxu0
        %736 = vmatprep.mubr.bf16.mxu0 0
        %737 = vmatmul.mubr.bf16.gmra.mrb[0].mxu0 %v438
        %v738 = vpop.f32.mrb[0].mxu0
        %v739 = vadd.f32 %v582, %v738
        %v740 = vpop.f32.mrb[0].mxu0
        %v741 = vpop.f32.mrb[0].mxu0
        %v742 = vadd.f32 %v582, %v741
        %v743 = vpop.f32.mrb[0].mxu0
        %744 = vdwg.mxu0
        %v745 = vpack.c.bf16 %v502, %v499
        %v746 = vpack.c.bf16 %v510, %v507
        %v747 = vpack.c.bf16 %v518, %v515
        %v748 = vpack.c.bf16 %v526, %v523
        %v749 = vpack.c.bf16 %v534, %v531
        %v750 = vpack.c.bf16 %v542, %v539
        %v751 = vpack.c.bf16 %v550, %v547
        %v752 = vpack.c.bf16 %v558, %v555
        %v761 = vunpack.c.l.b16 %v745
        %v762 = vunpack.c.h.b16 %v745
        %v763 = vunpack.c.l.b16 %v746
        %v764 = vunpack.c.h.b16 %v746
        %v765 = vunpack.c.l.b16 %v747
        %v766 = vunpack.c.h.b16 %v747
        %v767 = vunpack.c.l.b16 %v748
        %v768 = vunpack.c.h.b16 %v748
        %v769 = vunpack.c.l.b16 %v749
        %v770 = vunpack.c.h.b16 %v749
        %v771 = vunpack.c.l.b16 %v750
        %v772 = vunpack.c.h.b16 %v750
        %v773 = vunpack.c.l.b16 %v751
        %v774 = vunpack.c.h.b16 %v751
        %v775 = vunpack.c.l.b16 %v752
        %v776 = vunpack.c.h.b16 %v752
        %v777 = vpack.c.b16 %v761, %v761
        %v778 = vpack.c.b16 %v762, %v762
        %v779 = vpack.c.b16 %v763, %v763
        %v780 = vpack.c.b16 %v764, %v764
        %v781 = vpack.c.b16 %v765, %v765
        %v782 = vpack.c.b16 %v766, %v766
        %v783 = vpack.c.b16 %v767, %v767
        %v784 = vpack.c.b16 %v768, %v768
        %v785 = vpack.c.b16 %v769, %v769
        %v786 = vpack.c.b16 %v770, %v770
        %v787 = vpack.c.b16 %v771, %v771
        %v788 = vpack.c.b16 %v772, %v772
        %v789 = vpack.c.b16 %v773, %v773
        %v790 = vpack.c.b16 %v774, %v774
        %v791 = vpack.c.b16 %v775, %v775
        %v792 = vpack.c.b16 %v776, %v776
        %809 = vst [vmem:[%s275] sm:$0xf] %v777
        %810 = vst [vmem:[%s275 + $0x4] sm:$0xf] %v778
        %811 = vst [vmem:[%s275 + $0x8] sm:$0xf] %v779
        %812 = vst [vmem:[%s275 + $0xc] sm:$0xf] %v780
        %813 = vst [vmem:[%s275 + $0x10] sm:$0xf] %v781
        %814 = vst [vmem:[%s275 + $0x14] sm:$0xf] %v782
        %815 = vst [vmem:[%s275 + $0x18] sm:$0xf] %v783
        %816 = vst [vmem:[%s275 + $0x1c] sm:$0xf] %v784
        %817 = vst [vmem:[%s275 + $0x20] sm:$0xf] %v785
        %818 = vst [vmem:[%s275 + $0x24] sm:$0xf] %v786
        %819 = vst [vmem:[%s275 + $0x28] sm:$0xf] %v787
        %820 = vst [vmem:[%s275 + $0x2c] sm:$0xf] %v788
        %821 = vst [vmem:[%s275 + $0x30] sm:$0xf] %v789
        %822 = vst [vmem:[%s275 + $0x34] sm:$0xf] %v790
        %823 = vst [vmem:[%s275 + $0x38] sm:$0xf] %v791
        %824 = vst [vmem:[%s275 + $0x3c] sm:$0xf] %v792
        %v825 = vpack.c.bf16 %v686, %v683
        %v826 = vpack.c.bf16 %v694, %v691
        %v827 = vpack.c.bf16 %v702, %v699
        %v828 = vpack.c.bf16 %v710, %v707
        %v829 = vpack.c.bf16 %v718, %v715
        %v830 = vpack.c.bf16 %v726, %v723
        %v831 = vpack.c.bf16 %v734, %v731
        %v832 = vpack.c.bf16 %v742, %v739
        %v841 = vunpack.c.l.b16 %v825
        %v842 = vunpack.c.h.b16 %v825
        %v843 = vunpack.c.l.b16 %v826
        %v844 = vunpack.c.h.b16 %v826
        %v845 = vunpack.c.l.b16 %v827
        %v846 = vunpack.c.h.b16 %v827
        %v847 = vunpack.c.l.b16 %v828
        %v848 = vunpack.c.h.b16 %v828
        %v849 = vunpack.c.l.b16 %v829
        %v850 = vunpack.c.h.b16 %v829
        %v851 = vunpack.c.l.b16 %v830
        %v852 = vunpack.c.h.b16 %v830
        %v853 = vunpack.c.l.b16 %v831
        %v854 = vunpack.c.h.b16 %v831
        %v855 = vunpack.c.l.b16 %v832
        %v856 = vunpack.c.h.b16 %v832
        %v857 = vpack.c.b16 %v841, %v841
        %v858 = vpack.c.b16 %v842, %v842
        %v859 = vpack.c.b16 %v843, %v843
        %v860 = vpack.c.b16 %v844, %v844
        %v861 = vpack.c.b16 %v845, %v845
        %v862 = vpack.c.b16 %v846, %v846
        %v863 = vpack.c.b16 %v847, %v847
        %v864 = vpack.c.b16 %v848, %v848
        %v865 = vpack.c.b16 %v849, %v849
        %v866 = vpack.c.b16 %v850, %v850
        %v867 = vpack.c.b16 %v851, %v851
        %v868 = vpack.c.b16 %v852, %v852
        %v869 = vpack.c.b16 %v853, %v853
        %v870 = vpack.c.b16 %v854, %v854
        %v871 = vpack.c.b16 %v855, %v855
        %v872 = vpack.c.b16 %v856, %v856
        %889 = vst [vmem:[%s282] sm:$0xf] %v857
        %890 = vst [vmem:[%s282 + $0x4] sm:$0xf] %v858
        %891 = vst [vmem:[%s282 + $0x8] sm:$0xf] %v859
        %892 = vst [vmem:[%s282 + $0xc] sm:$0xf] %v860
        %893 = vst [vmem:[%s282 + $0x10] sm:$0xf] %v861
        %894 = vst [vmem:[%s282 + $0x14] sm:$0xf] %v862
        %895 = vst [vmem:[%s282 + $0x18] sm:$0xf] %v863
        %896 = vst [vmem:[%s282 + $0x1c] sm:$0xf] %v864
        %897 = vst [vmem:[%s282 + $0x20] sm:$0xf] %v865
        %898 = vst [vmem:[%s282 + $0x24] sm:$0xf] %v866
        %899 = vst [vmem:[%s282 + $0x28] sm:$0xf] %v867
        %900 = vst [vmem:[%s282 + $0x2c] sm:$0xf] %v868
        %901 = vst [vmem:[%s282 + $0x30] sm:$0xf] %v869
        %902 = vst [vmem:[%s282 + $0x34] sm:$0xf] %v870
        %903 = vst [vmem:[%s282 + $0x38] sm:$0xf] %v871
        %904 = vst [vmem:[%s282 + $0x3c] sm:$0xf] %v872
        %s905 = sand.u32 %s158, 1
        %s906 = scalar_lea.sflag [#allocation3], %s905
        %s907 = sand.u32 %s158, 1
        %s908 = smul.addr %s907, 64
        %s909 = scalar_lea.vmem [#allocation2], %s908
        %s910 = sand.u32 %s186, 1
        %s911 = scalar_lea.sflag [#allocation5], %s910
        %s912 = sand.u32 %s186, 1
        %s913 = smul.addr %s912, 64
        %s914 = scalar_lea.vmem [#allocation4], %s913
        // Predicated region
        $region41: #{tpu_custom_call.1} parent=39 // pred_check
          %p915 = pneg %p168
        $region42: #{tpu_custom_call.1} parent=39 // pred_check_branch
          %917 = sbr.rel (%p915) target = $region44
        $region43: #{tpu_custom_call.1} parent=39 // pred_region
          %s918 = smul.u32 16, %s29
          %s920 = ssub.s32 1024, 1024
          %921 = vsyncadd %s906, %s920
          %s922 = smul.addr %s28, 16
          %s923 = sadd.s32 %s918, %s922
          %s924 = smul.addr %s923, 64
          %s925 = scalar_lea.hbm %s5, %s924
          %s926 = sshll.u32 %s909, 4
          %s927 = int_to_ptr.vmem [resolvable:$true] %s926
          %932 = dma.vmem_to_hbm [thread:$0]  %s927, 1024, %s925, %s906, 64, 64, 4
        $region44: #{tpu_custom_call.1} parent=39 // pred_fallthru
          _
        // Predicated region
        $region45: #{tpu_custom_call.1} parent=39 // pred_check
          %p933 = pneg %p196
        $region46: #{tpu_custom_call.1} parent=39 // pred_check_branch
          %935 = sbr.rel (%p933) target = $region48
        $region47: #{tpu_custom_call.1} parent=39 // pred_region
          %s936 = smul.u32 16, %s29
          %s938 = ssub.s32 1024, 1024
          %939 = vsyncadd %s911, %s938
          %s940 = smul.addr %s28, 16
          %s941 = sadd.s32 %s936, %s940
          %s942 = smul.addr %s941, 64
          %s943 = scalar_lea.hbm %s6, %s942
          %s944 = sshll.u32 %s914, 4
          %s945 = int_to_ptr.vmem [resolvable:$true] %s944
          %950 = dma.vmem_to_hbm [thread:$0]  %s945, 1024, %s943, %s911, 64, 64, 4
        $region48: #{tpu_custom_call.1} parent=39 // pred_fallthru
          _
      $region40: #{tpu_custom_call.1} parent=5 // pred_fallthru
        _
      %p951 = scmp.le.s32.totalorder 2, %s19
      // Predicated region
      $region49: #{tpu_custom_call.1} parent=5 // pred_check
        %p952 = pneg %p951
      $region50: #{tpu_custom_call.1} parent=5 // pred_check_branch
        %954 = sbr.rel (%p952) target = $region52
      $region51: #{tpu_custom_call.1} parent=5 // pred_region
        %s955 = ssub.s32 %s19, 2
        // Predicated region
        $region53: #{tpu_custom_call.1} parent=51 // pred_check
          %p956 = pneg %p174
        $region54: #{tpu_custom_call.1} parent=51 // pred_check_branch
          %958 = sbr.rel (%p956) target = $region56
        $region55: #{tpu_custom_call.1} parent=51 // pred_region
          %s959 = sand.u32 %s159, 1
          %s960 = scalar_lea.sflag [#allocation3], %s959
          %s961 = sand.u32 %s159, 1
          %s962 = smul.addr %s961, 64
          %s963 = scalar_lea.vmem [#allocation2], %s962
          %964 = dma.done %s960, 1024
        $region56: #{tpu_custom_call.1} parent=51 // pred_fallthru
          _
        // Predicated region
        $region57: #{tpu_custom_call.1} parent=51 // pred_check
          %p965 = pneg %p202
        $region58: #{tpu_custom_call.1} parent=51 // pred_check_branch
          %967 = sbr.rel (%p965) target = $region60
        $region59: #{tpu_custom_call.1} parent=51 // pred_region
          %s968 = sand.u32 %s187, 1
          %s969 = scalar_lea.sflag [#allocation5], %s968
          %s970 = sand.u32 %s187, 1
          %s971 = smul.addr %s970, 64
          %s972 = scalar_lea.vmem [#allocation4], %s971
          %973 = dma.done %s969, 1024
        $region60: #{tpu_custom_call.1} parent=51 // pred_fallthru
          _
      $region52: #{tpu_custom_call.1} parent=5 // pred_fallthru
        _
    $region6: #{tpu_custom_call.1} parent=1 // loop_footer
      %s23 = sadd.s32 1, %s19
    $region7: #{tpu_custom_call.1} parent=1 // loop_footer_branch
      %18 = sbr.rel target = $region3
    $region8: #{tpu_custom_call.1} parent=1 // loop_exit
      _
    %974 = vsyncpa [#allocation3], 1
    %s975 = scalar_lea.sflag [#allocation3], 1
    %976 = vsyncpa %s975, 1
    %977 = vsyncpa [#allocation5], 1
    %s978 = scalar_lea.sflag [#allocation5], 1
    %979 = vsyncpa %s978, 1

</llo_original>
